<compile_context>
chip_gen: v7x
topology: tpu7x:2x2x1
jax: 0.10.0
libtpu: 0.0.40
codegen_flags: <defaults>
</compile_context>

<pallas_src>
import functools

import jax
import jax.numpy as jnp
from jax.experimental import pallas as pl
from jax.experimental.pallas import tpu as pltpu


def _round_up(x, m):
    return -(-x // m) * m


def _sublane_tile(dtype):
    return {4: 8, 2: 16, 1: 32}.get(jnp.dtype(dtype).itemsize, 8)


def _divisors(n):
    out = set()
    i = 1
    while i * i <= n:
        if n % i == 0:
            out.add(i)
            out.add(n // i)
        i += 1
    return sorted(out)


def _vmem_limits():
    """(scoped vmem_limit_bytes, batch-sizing budget) — conservative on v7x."""
    limit = 32 << 20  # safe on every generation (v7x: 64 MiB physical per TC)
    try:
        if int(pltpu.get_tpu_info().vmem_capacity_bytes) >= (128 << 20):
            limit = 64 << 20  # v5e / v6e: 128 MiB physical -> bigger blocks
    except Exception:
        pass
    return limit, limit - (8 << 20)


def _bilinear_weight_matrix(in_size, out_size, align_corners):
    """(out_size, in_size) 1-D bilinear interpolation matrix, PyTorch semantics."""
    i = jnp.arange(out_size, dtype=jnp.float32)
    if align_corners:
        scale = (in_size - 1) / (out_size - 1) if out_size > 1 else 0.0
        src = i * scale
    else:
        scale = in_size / out_size
        src = jnp.maximum((i + 0.5) * scale - 0.5, 0.0)  # PyTorch clamps at 0
    i0 = jnp.clip(jnp.floor(src).astype(jnp.int32), 0, in_size - 1)
    i1 = jnp.minimum(i0 + 1, in_size - 1)
    frac = src - i0.astype(jnp.float32)
    oh0 = jax.nn.one_hot(i0, in_size, dtype=jnp.float32)
    oh1 = jax.nn.one_hot(i1, in_size, dtype=jnp.float32)
    return (1.0 - frac)[:, None] * oh0 + frac[:, None] * oh1


def _choose_batch(nc, aligned, fits):
    """Largest divisor of nc that is aligned and fits the VMEM budget."""
    cand = [d for d in _divisors(nc) if aligned(d) and fits(d)]
    if not cand:
        return None
    b = max(cand)
    if nc // b == 1:
        # Prefer >=2 grid steps (keeps v7x's second TensorCore busy) as long
        # as it does not shrink the block by more than 4x.
        multi = [d for d in cand if d < nc]
        if multi and max(multi) * 4 >= nc:
            b = max(multi)
    return b


# --------------------------- fused path kernel ------------------------------
# One lane-dense MXU matmul per grid step:
#   out(B, OH*OW) = x(B, IH*IW) @ W(IH*IW, OH*OW)
def _fused_kernel(w_ref, x_ref, o_ref):
    x = x_ref[...].astype(jnp.float32)
    o_ref[...] = jnp.dot(
        x, w_ref[...], preferred_element_type=jnp.float32
    ).astype(o_ref.dtype)


# ------------------------- separable path kernel ----------------------------
# Per-image out = Wh @ img @ Ww^T; images indexed on the (free) leading dim.
def _separable_kernel(wh_ref, wwt_ref, x_ref, o_ref, *, batch, h_first):
    wh = wh_ref[...]    # (OH, IH) f32
    wwt = wwt_ref[...]  # (IW, OW) f32

    def one(b):
        img = x_ref[b].astype(jnp.float32)  # (IH, IW)
        if h_first:
            t = jnp.dot(wh, img, preferred_element_type=jnp.float32)    # (OH, IW)
            out = jnp.dot(t, wwt, preferred_element_type=jnp.float32)   # (OH, OW)
        else:
            t = jnp.dot(img, wwt, preferred_element_type=jnp.float32)   # (IH, OW)
            out = jnp.dot(wh, t, preferred_element_type=jnp.float32)    # (OH, OW)
        o_ref[b] = out.astype(o_ref.dtype)

    if batch <= 8:
        for b in range(batch):  # short fixed trip-count: static unroll
            one(b)
    else:
        def body(b, carry):
            one(b)
            return carry
        jax.lax.fori_loop(0, batch, body, 0)


@functools.partial(jax.jit, static_argnames=("size", "align_corners"))
def upsample_bilinear2d(x, size, align_corners=False):
    """Equivalent of F.interpolate(x, size=size, mode='bilinear', align_corners=...)."""
    n, c, ih, iw = x.shape
    oh, ow = size
    nc = n * c
    dtype = x.dtype
    itemsize = jnp.dtype(dtype).itemsize
    sub = _sublane_tile(dtype)
    limit, budget = _vmem_limits()

    wh = _bilinear_weight_matrix(ih, oh, align_corners)  # (OH, IH) f32
    ww = _bilinear_weight_matrix(iw, ow, align_corners)  # (OW, IW) f32

    k = ih * iw
    m = oh * ow
    w_comb_bytes = 4 * _round_up(k, 8) * _round_up(m, 128)
    use_fused = w_comb_bytes <= (8 << 20)

    if use_fused:
        # W[h*IW+w, o*OW+p] = Wh[o,h] * Ww[p,w]  (== kron(Wh, Ww)^T)
        w_comb = jnp.einsum("oh,pw->hwop", wh, ww).reshape(k, m)

        def vmem_use(b):  # padded-tile footprint of one grid step
            rows = _round_up(b, sub)
            io = 2 * rows * (_round_up(k, 128) + _round_up(m, 128)) * itemsize
            comp = rows * (_round_up(k, 128) + _round_up(m, 128)) * 4
            return 2 * w_comb_bytes + io + comp

        batch = _choose_batch(
            nc,
            aligned=lambda b: b == nc or b % sub == 0,
            fits=lambda b: vmem_use(b) <= budget,
        )

        nc_pad = nc
        if batch is None:
            # No aligned divisor fits the budget: padded-image-axis fallback.
            batch = sub
            while 2 * batch < nc and vmem_use(2 * batch) <= budget:
                batch *= 2
            nc_pad = _round_up(nc, batch)

        x2d = x.reshape(nc, k)  # metadata-only
        if nc_pad != nc:
            x2d = jnp.pad(x2d, ((0, nc_pad - nc), (0, 0)))

        out2d = pl.pallas_call(
            _fused_kernel,
            out_shape=jax.ShapeDtypeStruct((nc_pad, m), dtype),
            grid_spec=pltpu.PrefetchScalarGridSpec(
                num_scalar_prefetch=0,
                grid=(nc_pad // batch,),
                in_specs=[
                    pl.BlockSpec((k, m), lambda i: (0, 0)),      # grid-invariant weight
                    pl.BlockSpec((batch, k), lambda i: (i, 0)),
                ],
                out_specs=pl.BlockSpec((batch, m), lambda i: (i, 0)),
            ),
            compiler_params=pltpu.CompilerParams(
                dimension_semantics=("parallel",),
                vmem_limit_bytes=limit,
            ),
        )(w_comb, x2d)

        out2d = out2d[:nc] if nc_pad != nc else out2d
        return out2d.reshape(n, c, oh, ow)

    # ---------------- separable path (large images) ----------------
    wwt = ww.T  # (IW, OW)

    # Matmul order chosen by MXU-padded cost, not raw FLOPs.
    mxu = 256
    cost_h_first = (_round_up(oh, 8) * _round_up(ih, mxu) * _round_up(iw, mxu)
                    + _round_up(oh, 8) * _round_up(iw, mxu) * _round_up(ow, mxu))
    cost_w_first = (_round_up(ih, 8) * _round_up(iw, mxu) * _round_up(ow, mxu)
                    + _round_up(oh, 8) * _round_up(ih, mxu) * _round_up(ow, mxu))
    h_first = cost_h_first <= cost_w_first

    w_bytes = 2 * 4 * (_round_up(oh, 8) * _round_up(ih, 128)
                       + _round_up(iw, 8) * _round_up(ow, 128))
    x_img = _round_up(ih, sub) * _round_up(iw, 128) * itemsize
    o_img = _round_up(oh, sub) * _round_up(ow, 128) * itemsize
    t_img = 4 * (_round_up(oh, 8) * _round_up(iw, 128) if h_first
                 else _round_up(ih, 8) * _round_up(ow, 128))
    comp_img = 4 * (_round_up(ih, 8) * _round_up(iw, 128)
                    + _round_up(oh, 8) * _round_up(ow, 128))

    def vmem_use(b):
        return w_bytes + b * (2 * (x_img + o_img) + t_img + comp_img)

    batch = _choose_batch(nc, aligned=lambda b: True,
                          fits=lambda b: vmem_use(b) <= budget)
    if batch is None:
        # TODO(synk): a single image exceeding the VMEM budget would need
        # intra-image tiling of the resample; fall back to 1 image / step.
        batch = 1

    x3d = x.reshape(nc, ih, iw)  # metadata-only
    kernel = functools.partial(_separable_kernel, batch=batch, h_first=h_first)
    out3d = pl.pallas_call(
        kernel,
        out_shape=jax.ShapeDtypeStruct((nc, oh, ow), dtype),
        grid_spec=pltpu.PrefetchScalarGridSpec(
            num_scalar_prefetch=0,
            grid=(nc // batch,),
            in_specs=[
                pl.BlockSpec((oh, ih), lambda i: (0, 0)),        # grid-invariant
                pl.BlockSpec((iw, ow), lambda i: (0, 0)),        # grid-invariant
                pl.BlockSpec((batch, ih, iw), lambda i: (i, 0, 0)),
            ],
            out_specs=pl.BlockSpec((batch, oh, ow), lambda i: (i, 0, 0)),
        ),
        compiler_params=pltpu.CompilerParams(
            dimension_semantics=("parallel",),
            vmem_limit_bytes=limit,
        ),
    )(wh, wwt, x3d)
    return out3d.reshape(n, c, oh, ow)


class ModelWithSize:
    """Mirror of the PyTorch module (size + align_corners stored at init)."""

    def __init__(self, size=None, align_corners=None):
        self.size = tuple(size)
        # F.interpolate treats align_corners=None as False for 'bilinear'.
        self.align_corners = bool(align_corners) if align_corners is not None else False

    def __call__(self, x):
        return upsample_bilinear2d(x, size=self.size, align_corners=self.align_corners)


if __name__ == "__main__":
    key = jax.random.PRNGKey(0)
    x = jax.random.normal(key, (2, 4, 16, 16), dtype=jnp.float32)

    # Case 1: default align_corners (None -> False), 16x16 -> 32x32
    model = ModelWithSize(size=(32, 32), align_corners=None)
    y = model(x)
    jax.block_until_ready(y)
    assert y.shape == (2, 4, 32, 32), y.shape
    assert y.dtype == x.dtype
    wh = _bilinear_weight_matrix(16, 32, False)
    ww = _bilinear_weight_matrix(16, 32, False)
    ref = jnp.einsum("oh,nchw,pw->ncop", wh, x, ww)
    assert jnp.allclose(y, ref, atol=1e-5, rtol=1e-5)

    # Case 2: asymmetric resize with align_corners=True, 16x16 -> 24x40
    model2 = ModelWithSize(size=(24, 40), align_corners=True)
    y2 = model2(x)
    jax.block_until_ready(y2)
    assert y2.shape == (2, 4, 24, 40), y2.shape
    wh2 = _bilinear_weight_matrix(16, 24, True)
    ww2 = _bilinear_weight_matrix(16, 40, True)
    ref2 = jnp.einsum("oh,nchw,pw->ncop", wh2, x, ww2)
    assert jnp.allclose(y2, ref2, atol=1e-5, rtol=1e-5)

    print("KERNEL_OK")
</pallas_src>

<mosaic_0001>
module attributes {stable_mosaic.version = 11 : i64} {
  func.func @_fused_kernel(%arg0: i32, %arg1: memref<256x1024xf32, #tpu.memory_space<vmem>>, %arg2: memref<8x256xf32, #tpu.memory_space<vmem>>, %arg3: memref<8x1024xf32, #tpu.memory_space<vmem>>) attributes {dimension_semantics = [#tpu.dimension_semantics<parallel>], iteration_bounds = array<i64: 1>, scalar_prefetch = 0 : i64, scratch_operands = 0 : i64, tpu.core_type = #tpu.core_type<tc>, window_params = [{pipeline_mode = #tpu.pipeline_mode<synchronous>, transform_indices = @transform_0, window_bounds = array<i64: 256, 1024>}, {transform_indices = @transform_1, window_bounds = array<i64: 8, 256>}, {transform_indices = @transform_2, window_bounds = array<i64: 8, 1024>}]} {
    %c0 = arith.constant 0 : index
    %c0_0 = arith.constant 0 : index
    %0 = vector.load %arg2[%c0, %c0_0] : memref<8x256xf32, #tpu.memory_space<vmem>>, vector<8x256xf32>
    %c0_1 = arith.constant 0 : index
    %c0_2 = arith.constant 0 : index
    %1 = vector.load %arg1[%c0_1, %c0_2] : memref<256x1024xf32, #tpu.memory_space<vmem>>, vector<256x1024xf32>
    %cst = arith.constant dense<0.000000e+00> : vector<8x1024xf32>
    %2 = tpu.matmul %0, %1, %cst {dimension_numbers = #tpu.dot_dimension_numbers<[1], [0], [0], [1], [0, 0, 1, 1], [], []>} : vector<8x256xf32>, vector<256x1024xf32>, vector<8x1024xf32> -> vector<8x1024xf32>
    %c0_3 = arith.constant 0 : index
    %c0_4 = arith.constant 0 : index
    %3 = vector.load %arg3[%c0_3, %c0_4] : memref<8x1024xf32, #tpu.memory_space<vmem>>, vector<8x1024xf32>
    tpu.vector_store %arg3[%c0_3, %c0_4], %2 {strides = array<i32>} : memref<8x1024xf32, #tpu.memory_space<vmem>>, vector<8x1024xf32>,
    return
  }
  func.func @transform_0(%arg0: i32) -> (i32, i32) {
    %c0_i32 = arith.constant 0 : i32
    %c0_i32_0 = arith.constant 0 : i32
    %c0_i32_1 = arith.constant 0 : i32
    return %c0_i32, %c0_i32_0 : i32, i32
  }
  func.func @transform_1(%arg0: i32) -> (i32, i32) {
    %c0_i32 = arith.constant 0 : i32
    %c0_i32_0 = arith.constant 0 : i32
    return %arg0, %c0_i32 : i32, i32
  }
  func.func @transform_2(%arg0: i32) -> (i32, i32) {
    %c0_i32 = arith.constant 0 : i32
    %c0_i32_0 = arith.constant 0 : i32
    return %arg0, %c0_i32 : i32, i32
  }
}

</mosaic_0001>

<llo_original>
// kernel: upsample_bilinear2d.1
$region0: #{upsample_bilinear2d.1}
  #allocation0 [shape = 'u32[]', space=smem, size = 0x4, offset = 0x4, fixed_abs, tag = 'smem constant byte address 0x4 - core index']
  #allocation1 [shape = 'u32[144,128]{1,0:T(1,128)}', space=vmem, size = 0x12000, scoped, tag = 'internal scratch']
  %s0 = inlined_call_operand.vmem [shape: f32[256,1024], index: 0, kind: input, shape index: {}]
  %s1 = inlined_call_operand.vmem [shape: f32[8,256], index: 1, kind: input, shape index: {}]
  %s2 = inlined_call_operand.vmem [shape: f32[8,1024], index: 2, kind: output, shape index: {}]
  %s3 = sld [smem:[#allocation0]]
  $region18: #{upsample_bilinear2d.1} parent=0
    _
  %s5 = ssub.s32 1, %s3
  %s6 = scalar_select 0, %s5, %s3
  // Predicated region
  $region2: #{upsample_bilinear2d.1} parent=0 // pred_check
    _
  $region3: #{upsample_bilinear2d.1} parent=0 // pred_check_branch
    %8 = sbr.rel (0) target = $region5
  $region4: #{upsample_bilinear2d.1} parent=0 // pred_region
    _
  $region5: #{upsample_bilinear2d.1} parent=0 // pred_fallthru
    _
  // Predicated region
  $region6: #{upsample_bilinear2d.1} parent=0 // pred_check
    _
  $region7: #{upsample_bilinear2d.1} parent=0 // pred_check_branch
    %10 = sbr.rel (0) target = $region9
  $region8: #{upsample_bilinear2d.1} parent=0 // pred_region
    _
  $region9: #{upsample_bilinear2d.1} parent=0 // pred_fallthru
    _
  %v11 = vld [vmem:[%s1] sm:$0xff]
  %v12 = vld [vmem:[%s1 + $0x8] sm:$0xff]
  %v13 = vld [vmem:[%s0] sm:$0xff]
  %v14 = vld [vmem:[%s0 + $0x8] sm:$0xff]
  %v15 = vld [vmem:[%s0 + $0x10] sm:$0xff]
  %v16 = vld [vmem:[%s0 + $0x18] sm:$0xff]
  %v17 = vld [vmem:[%s0 + $0x20] sm:$0xff]
  %v18 = vld [vmem:[%s0 + $0x28] sm:$0xff]
  %v19 = vld [vmem:[%s0 + $0x30] sm:$0xff]
  %v20 = vld [vmem:[%s0 + $0x38] sm:$0xff]
  %v21 = vld [vmem:[%s0 + $0x40] sm:$0xff]
  %v22 = vld [vmem:[%s0 + $0x48] sm:$0xff]
  %v23 = vld [vmem:[%s0 + $0x50] sm:$0xff]
  %v24 = vld [vmem:[%s0 + $0x58] sm:$0xff]
  %v25 = vld [vmem:[%s0 + $0x60] sm:$0xff]
  %v26 = vld [vmem:[%s0 + $0x68] sm:$0xff]
  %v27 = vld [vmem:[%s0 + $0x70] sm:$0xff]
  %v28 = vld [vmem:[%s0 + $0x78] sm:$0xff]
  %v29 = vld [vmem:[%s0 + $0x80] sm:$0xff]
  %v30 = vld [vmem:[%s0 + $0x88] sm:$0xff]
  %v31 = vld [vmem:[%s0 + $0x90] sm:$0xff]
  %v32 = vld [vmem:[%s0 + $0x98] sm:$0xff]
  %v33 = vld [vmem:[%s0 + $0xa0] sm:$0xff]
  %v34 = vld [vmem:[%s0 + $0xa8] sm:$0xff]
  %v35 = vld [vmem:[%s0 + $0xb0] sm:$0xff]
  %v36 = vld [vmem:[%s0 + $0xb8] sm:$0xff]
  %v37 = vld [vmem:[%s0 + $0xc0] sm:$0xff]
  %v38 = vld [vmem:[%s0 + $0xc8] sm:$0xff]
  %v39 = vld [vmem:[%s0 + $0xd0] sm:$0xff]
  %v40 = vld [vmem:[%s0 + $0xd8] sm:$0xff]
  %v41 = vld [vmem:[%s0 + $0xe0] sm:$0xff]
  %v42 = vld [vmem:[%s0 + $0xe8] sm:$0xff]
  %v43 = vld [vmem:[%s0 + $0xf0] sm:$0xff]
  %v44 = vld [vmem:[%s0 + $0xf8] sm:$0xff]
  %v45 = vld [vmem:[%s0 + $0x100] sm:$0xff]
  %v46 = vld [vmem:[%s0 + $0x108] sm:$0xff]
  %v47 = vld [vmem:[%s0 + $0x110] sm:$0xff]
  %v48 = vld [vmem:[%s0 + $0x118] sm:$0xff]
  %v49 = vld [vmem:[%s0 + $0x120] sm:$0xff]
  %v50 = vld [vmem:[%s0 + $0x128] sm:$0xff]
  %v51 = vld [vmem:[%s0 + $0x130] sm:$0xff]
  %v52 = vld [vmem:[%s0 + $0x138] sm:$0xff]
  %v53 = vld [vmem:[%s0 + $0x140] sm:$0xff]
  %v54 = vld [vmem:[%s0 + $0x148] sm:$0xff]
  %v55 = vld [vmem:[%s0 + $0x150] sm:$0xff]
  %v56 = vld [vmem:[%s0 + $0x158] sm:$0xff]
  %v57 = vld [vmem:[%s0 + $0x160] sm:$0xff]
  %v58 = vld [vmem:[%s0 + $0x168] sm:$0xff]
  %v59 = vld [vmem:[%s0 + $0x170] sm:$0xff]
  %v60 = vld [vmem:[%s0 + $0x178] sm:$0xff]
  %v61 = vld [vmem:[%s0 + $0x180] sm:$0xff]
  %v62 = vld [vmem:[%s0 + $0x188] sm:$0xff]
  %v63 = vld [vmem:[%s0 + $0x190] sm:$0xff]
  %v64 = vld [vmem:[%s0 + $0x198] sm:$0xff]
  %v65 = vld [vmem:[%s0 + $0x1a0] sm:$0xff]
  %v66 = vld [vmem:[%s0 + $0x1a8] sm:$0xff]
  %v67 = vld [vmem:[%s0 + $0x1b0] sm:$0xff]
  %v68 = vld [vmem:[%s0 + $0x1b8] sm:$0xff]
  %v69 = vld [vmem:[%s0 + $0x1c0] sm:$0xff]
  %v70 = vld [vmem:[%s0 + $0x1c8] sm:$0xff]
  %v71 = vld [vmem:[%s0 + $0x1d0] sm:$0xff]
  %v72 = vld [vmem:[%s0 + $0x1d8] sm:$0xff]
  %v73 = vld [vmem:[%s0 + $0x1e0] sm:$0xff]
  %v74 = vld [vmem:[%s0 + $0x1e8] sm:$0xff]
  %v75 = vld [vmem:[%s0 + $0x1f0] sm:$0xff]
  %v76 = vld [vmem:[%s0 + $0x1f8] sm:$0xff]
  %v77 = vld [vmem:[%s0 + $0x200] sm:$0xff]
  %v78 = vld [vmem:[%s0 + $0x208] sm:$0xff]
  %v79 = vld [vmem:[%s0 + $0x210] sm:$0xff]
  %v80 = vld [vmem:[%s0 + $0x218] sm:$0xff]
  %v81 = vld [vmem:[%s0 + $0x220] sm:$0xff]
  %v82 = vld [vmem:[%s0 + $0x228] sm:$0xff]
  %v83 = vld [vmem:[%s0 + $0x230] sm:$0xff]
  %v84 = vld [vmem:[%s0 + $0x238] sm:$0xff]
  %v85 = vld [vmem:[%s0 + $0x240] sm:$0xff]
  %v86 = vld [vmem:[%s0 + $0x248] sm:$0xff]
  %v87 = vld [vmem:[%s0 + $0x250] sm:$0xff]
  %v88 = vld [vmem:[%s0 + $0x258] sm:$0xff]
  %v89 = vld [vmem:[%s0 + $0x260] sm:$0xff]
  %v90 = vld [vmem:[%s0 + $0x268] sm:$0xff]
  %v91 = vld [vmem:[%s0 + $0x270] sm:$0xff]
  %v92 = vld [vmem:[%s0 + $0x278] sm:$0xff]
  %v93 = vld [vmem:[%s0 + $0x280] sm:$0xff]
  %v94 = vld [vmem:[%s0 + $0x288] sm:$0xff]
  %v95 = vld [vmem:[%s0 + $0x290] sm:$0xff]
  %v96 = vld [vmem:[%s0 + $0x298] sm:$0xff]
  %v97 = vld [vmem:[%s0 + $0x2a0] sm:$0xff]
  %v98 = vld [vmem:[%s0 + $0x2a8] sm:$0xff]
  %v99 = vld [vmem:[%s0 + $0x2b0] sm:$0xff]
  %v100 = vld [vmem:[%s0 + $0x2b8] sm:$0xff]
  %v101 = vld [vmem:[%s0 + $0x2c0] sm:$0xff]
  %v102 = vld [vmem:[%s0 + $0x2c8] sm:$0xff]
  %v103 = vld [vmem:[%s0 + $0x2d0] sm:$0xff]
  %v104 = vld [vmem:[%s0 + $0x2d8] sm:$0xff]
  %v105 = vld [vmem:[%s0 + $0x2e0] sm:$0xff]
  %v106 = vld [vmem:[%s0 + $0x2e8] sm:$0xff]
  %v107 = vld [vmem:[%s0 + $0x2f0] sm:$0xff]
  %v108 = vld [vmem:[%s0 + $0x2f8] sm:$0xff]
  %v109 = vld [vmem:[%s0 + $0x300] sm:$0xff]
  %v110 = vld [vmem:[%s0 + $0x308] sm:$0xff]
  %v111 = vld [vmem:[%s0 + $0x310] sm:$0xff]
  %v112 = vld [vmem:[%s0 + $0x318] sm:$0xff]
  %v113 = vld [vmem:[%s0 + $0x320] sm:$0xff]
  %v114 = vld [vmem:[%s0 + $0x328] sm:$0xff]
  %v115 = vld [vmem:[%s0 + $0x330] sm:$0xff]
  %v116 = vld [vmem:[%s0 + $0x338] sm:$0xff]
  %v117 = vld [vmem:[%s0 + $0x340] sm:$0xff]
  %v118 = vld [vmem:[%s0 + $0x348] sm:$0xff]
  %v119 = vld [vmem:[%s0 + $0x350] sm:$0xff]
  %v120 = vld [vmem:[%s0 + $0x358] sm:$0xff]
  %v121 = vld [vmem:[%s0 + $0x360] sm:$0xff]
  %v122 = vld [vmem:[%s0 + $0x368] sm:$0xff]
  %v123 = vld [vmem:[%s0 + $0x370] sm:$0xff]
  %v124 = vld [vmem:[%s0 + $0x378] sm:$0xff]
  %v125 = vld [vmem:[%s0 + $0x380] sm:$0xff]
  %v126 = vld [vmem:[%s0 + $0x388] sm:$0xff]
  %v127 = vld [vmem:[%s0 + $0x390] sm:$0xff]
  %v128 = vld [vmem:[%s0 + $0x398] sm:$0xff]
  %v129 = vld [vmem:[%s0 + $0x3a0] sm:$0xff]
  %v130 = vld [vmem:[%s0 + $0x3a8] sm:$0xff]
  %v131 = vld [vmem:[%s0 + $0x3b0] sm:$0xff]
  %v132 = vld [vmem:[%s0 + $0x3b8] sm:$0xff]
  %v133 = vld [vmem:[%s0 + $0x3c0] sm:$0xff]
  %v134 = vld [vmem:[%s0 + $0x3c8] sm:$0xff]
  %v135 = vld [vmem:[%s0 + $0x3d0] sm:$0xff]
  %v136 = vld [vmem:[%s0 + $0x3d8] sm:$0xff]
  %v137 = vld [vmem:[%s0 + $0x3e0] sm:$0xff]
  %v138 = vld [vmem:[%s0 + $0x3e8] sm:$0xff]
  %v139 = vld [vmem:[%s0 + $0x3f0] sm:$0xff]
  %v140 = vld [vmem:[%s0 + $0x3f8] sm:$0xff]
  %v141 = vld [vmem:[%s0 + $0x400] sm:$0xff]
  %v142 = vld [vmem:[%s0 + $0x408] sm:$0xff]
  %v143 = vld [vmem:[%s0 + $0x410] sm:$0xff]
  %v144 = vld [vmem:[%s0 + $0x418] sm:$0xff]
  %v145 = vld [vmem:[%s0 + $0x420] sm:$0xff]
  %v146 = vld [vmem:[%s0 + $0x428] sm:$0xff]
  %v147 = vld [vmem:[%s0 + $0x430] sm:$0xff]
  %v148 = vld [vmem:[%s0 + $0x438] sm:$0xff]
  %v149 = vld [vmem:[%s0 + $0x440] sm:$0xff]
  %v150 = vld [vmem:[%s0 + $0x448] sm:$0xff]
  %v151 = vld [vmem:[%s0 + $0x450] sm:$0xff]
  %v152 = vld [vmem:[%s0 + $0x458] sm:$0xff]
  %v153 = vld [vmem:[%s0 + $0x460] sm:$0xff]
  %v154 = vld [vmem:[%s0 + $0x468] sm:$0xff]
  %v155 = vld [vmem:[%s0 + $0x470] sm:$0xff]
  %v156 = vld [vmem:[%s0 + $0x478] sm:$0xff]
  %v157 = vld [vmem:[%s0 + $0x480] sm:$0xff]
  %v158 = vld [vmem:[%s0 + $0x488] sm:$0xff]
  %v159 = vld [vmem:[%s0 + $0x490] sm:$0xff]
  %v160 = vld [vmem:[%s0 + $0x498] sm:$0xff]
  %v161 = vld [vmem:[%s0 + $0x4a0] sm:$0xff]
  %v162 = vld [vmem:[%s0 + $0x4a8] sm:$0xff]
  %v163 = vld [vmem:[%s0 + $0x4b0] sm:$0xff]
  %v164 = vld [vmem:[%s0 + $0x4b8] sm:$0xff]
  %v165 = vld [vmem:[%s0 + $0x4c0] sm:$0xff]
  %v166 = vld [vmem:[%s0 + $0x4c8] sm:$0xff]
  %v167 = vld [vmem:[%s0 + $0x4d0] sm:$0xff]
  %v168 = vld [vmem:[%s0 + $0x4d8] sm:$0xff]
  %v169 = vld [vmem:[%s0 + $0x4e0] sm:$0xff]
  %v170 = vld [vmem:[%s0 + $0x4e8] sm:$0xff]
  %v171 = vld [vmem:[%s0 + $0x4f0] sm:$0xff]
  %v172 = vld [vmem:[%s0 + $0x4f8] sm:$0xff]
  %v173 = vld [vmem:[%s0 + $0x500] sm:$0xff]
  %v174 = vld [vmem:[%s0 + $0x508] sm:$0xff]
  %v175 = vld [vmem:[%s0 + $0x510] sm:$0xff]
  %v176 = vld [vmem:[%s0 + $0x518] sm:$0xff]
  %v177 = vld [vmem:[%s0 + $0x520] sm:$0xff]
  %v178 = vld [vmem:[%s0 + $0x528] sm:$0xff]
  %v179 = vld [vmem:[%s0 + $0x530] sm:$0xff]
  %v180 = vld [vmem:[%s0 + $0x538] sm:$0xff]
  %v181 = vld [vmem:[%s0 + $0x540] sm:$0xff]
  %v182 = vld [vmem:[%s0 + $0x548] sm:$0xff]
  %v183 = vld [vmem:[%s0 + $0x550] sm:$0xff]
  %v184 = vld [vmem:[%s0 + $0x558] sm:$0xff]
  %v185 = vld [vmem:[%s0 + $0x560] sm:$0xff]
  %v186 = vld [vmem:[%s0 + $0x568] sm:$0xff]
  %v187 = vld [vmem:[%s0 + $0x570] sm:$0xff]
  %v188 = vld [vmem:[%s0 + $0x578] sm:$0xff]
  %v189 = vld [vmem:[%s0 + $0x580] sm:$0xff]
  %v190 = vld [vmem:[%s0 + $0x588] sm:$0xff]
  %v191 = vld [vmem:[%s0 + $0x590] sm:$0xff]
  %v192 = vld [vmem:[%s0 + $0x598] sm:$0xff]
  %v193 = vld [vmem:[%s0 + $0x5a0] sm:$0xff]
  %v194 = vld [vmem:[%s0 + $0x5a8] sm:$0xff]
  %v195 = vld [vmem:[%s0 + $0x5b0] sm:$0xff]
  %v196 = vld [vmem:[%s0 + $0x5b8] sm:$0xff]
  %v197 = vld [vmem:[%s0 + $0x5c0] sm:$0xff]
  %v198 = vld [vmem:[%s0 + $0x5c8] sm:$0xff]
  %v199 = vld [vmem:[%s0 + $0x5d0] sm:$0xff]
  %v200 = vld [vmem:[%s0 + $0x5d8] sm:$0xff]
  %v201 = vld [vmem:[%s0 + $0x5e0] sm:$0xff]
  %v202 = vld [vmem:[%s0 + $0x5e8] sm:$0xff]
  %v203 = vld [vmem:[%s0 + $0x5f0] sm:$0xff]
  %v204 = vld [vmem:[%s0 + $0x5f8] sm:$0xff]
  %v205 = vld [vmem:[%s0 + $0x600] sm:$0xff]
  %v206 = vld [vmem:[%s0 + $0x608] sm:$0xff]
  %v207 = vld [vmem:[%s0 + $0x610] sm:$0xff]
  %v208 = vld [vmem:[%s0 + $0x618] sm:$0xff]
  %v209 = vld [vmem:[%s0 + $0x620] sm:$0xff]
  %v210 = vld [vmem:[%s0 + $0x628] sm:$0xff]
  %v211 = vld [vmem:[%s0 + $0x630] sm:$0xff]
  %v212 = vld [vmem:[%s0 + $0x638] sm:$0xff]
  %v213 = vld [vmem:[%s0 + $0x640] sm:$0xff]
  %v214 = vld [vmem:[%s0 + $0x648] sm:$0xff]
  %v215 = vld [vmem:[%s0 + $0x650] sm:$0xff]
  %v216 = vld [vmem:[%s0 + $0x658] sm:$0xff]
  %v217 = vld [vmem:[%s0 + $0x660] sm:$0xff]
  %v218 = vld [vmem:[%s0 + $0x668] sm:$0xff]
  %v219 = vld [vmem:[%s0 + $0x670] sm:$0xff]
  %v220 = vld [vmem:[%s0 + $0x678] sm:$0xff]
  %v221 = vld [vmem:[%s0 + $0x680] sm:$0xff]
  %v222 = vld [vmem:[%s0 + $0x688] sm:$0xff]
  %v223 = vld [vmem:[%s0 + $0x690] sm:$0xff]
  %v224 = vld [vmem:[%s0 + $0x698] sm:$0xff]
  %v225 = vld [vmem:[%s0 + $0x6a0] sm:$0xff]
  %v226 = vld [vmem:[%s0 + $0x6a8] sm:$0xff]
  %v227 = vld [vmem:[%s0 + $0x6b0] sm:$0xff]
  %v228 = vld [vmem:[%s0 + $0x6b8] sm:$0xff]
  %v229 = vld [vmem:[%s0 + $0x6c0] sm:$0xff]
  %v230 = vld [vmem:[%s0 + $0x6c8] sm:$0xff]
  %v231 = vld [vmem:[%s0 + $0x6d0] sm:$0xff]
  %v232 = vld [vmem:[%s0 + $0x6d8] sm:$0xff]
  %v233 = vld [vmem:[%s0 + $0x6e0] sm:$0xff]
  %v234 = vld [vmem:[%s0 + $0x6e8] sm:$0xff]
  %v235 = vld [vmem:[%s0 + $0x6f0] sm:$0xff]
  %v236 = vld [vmem:[%s0 + $0x6f8] sm:$0xff]
  %v237 = vld [vmem:[%s0 + $0x700] sm:$0xff]
  %v238 = vld [vmem:[%s0 + $0x708] sm:$0xff]
  %v239 = vld [vmem:[%s0 + $0x710] sm:$0xff]
  %v240 = vld [vmem:[%s0 + $0x718] sm:$0xff]
  %v241 = vld [vmem:[%s0 + $0x720] sm:$0xff]
  %v242 = vld [vmem:[%s0 + $0x728] sm:$0xff]
  %v243 = vld [vmem:[%s0 + $0x730] sm:$0xff]
  %v244 = vld [vmem:[%s0 + $0x738] sm:$0xff]
  %v245 = vld [vmem:[%s0 + $0x740] sm:$0xff]
  %v246 = vld [vmem:[%s0 + $0x748] sm:$0xff]
  %v247 = vld [vmem:[%s0 + $0x750] sm:$0xff]
  %v248 = vld [vmem:[%s0 + $0x758] sm:$0xff]
  %v249 = vld [vmem:[%s0 + $0x760] sm:$0xff]
  %v250 = vld [vmem:[%s0 + $0x768] sm:$0xff]
  %v251 = vld [vmem:[%s0 + $0x770] sm:$0xff]
  %v252 = vld [vmem:[%s0 + $0x778] sm:$0xff]
  %v253 = vld [vmem:[%s0 + $0x780] sm:$0xff]
  %v254 = vld [vmem:[%s0 + $0x788] sm:$0xff]
  %v255 = vld [vmem:[%s0 + $0x790] sm:$0xff]
  %v256 = vld [vmem:[%s0 + $0x798] sm:$0xff]
  %v257 = vld [vmem:[%s0 + $0x7a0] sm:$0xff]
  %v258 = vld [vmem:[%s0 + $0x7a8] sm:$0xff]
  %v259 = vld [vmem:[%s0 + $0x7b0] sm:$0xff]
  %v260 = vld [vmem:[%s0 + $0x7b8] sm:$0xff]
  %v261 = vld [vmem:[%s0 + $0x7c0] sm:$0xff]
  %v262 = vld [vmem:[%s0 + $0x7c8] sm:$0xff]
  %v263 = vld [vmem:[%s0 + $0x7d0] sm:$0xff]
  %v264 = vld [vmem:[%s0 + $0x7d8] sm:$0xff]
  %v265 = vld [vmem:[%s0 + $0x7e0] sm:$0xff]
  %v266 = vld [vmem:[%s0 + $0x7e8] sm:$0xff]
  %v267 = vld [vmem:[%s0 + $0x7f0] sm:$0xff]
  %v268 = vld [vmem:[%s0 + $0x7f8] sm:$0xff]
  %269 = vmatprep.subr.mxu0 %v14
  %270 = vmatpush1.msra.mxu0 %v13
  %271 = vmatprep.subr.mxu0 %v22
  %272 = vmatpush1.msra.mxu0 %v21
  %273 = vmatprep.subr.mxu0 %v30
  %274 = vmatpush1.msra.mxu0 %v29
  %275 = vmatprep.subr.mxu0 %v38
  %276 = vmatpush1.msra.mxu0 %v37
  %277 = vmatprep.subr.mxu0 %v46
  %278 = vmatpush1.msra.mxu0 %v45
  %279 = vmatprep.subr.mxu0 %v54
  %280 = vmatpush1.msra.mxu0 %v53
  %281 = vmatprep.subr.mxu0 %v62
  %282 = vmatpush1.msra.mxu0 %v61
  %283 = vmatprep.subr.mxu0 %v70
  %284 = vmatpush1.msra.mxu0 %v69
  %285 = vmatprep.subr.mxu0 %v78
  %286 = vmatpush1.msra.mxu0 %v77
  %287 = vmatprep.subr.mxu0 %v86
  %288 = vmatpush1.msra.mxu0 %v85
  %289 = vmatprep.subr.mxu0 %v94
  %290 = vmatpush1.msra.mxu0 %v93
  %291 = vmatprep.subr.mxu0 %v102
  %292 = vmatpush1.msra.mxu0 %v101
  %293 = vmatprep.subr.mxu0 %v110
  %294 = vmatpush1.msra.mxu0 %v109
  %295 = vmatprep.subr.mxu0 %v118
  %296 = vmatpush1.msra.mxu0 %v117
  %297 = vmatprep.subr.mxu0 %v126
  %298 = vmatpush1.msra.mxu0 %v125
  %299 = vmatprep.subr.mxu0 %v134
  %300 = vmatpush1.msra.mxu0 %v133
  %301 = vmatprep.subr.mxu0 %v142
  %302 = vmatpush1.msra.mxu0 %v141
  %303 = vmatprep.subr.mxu0 %v150
  %304 = vmatpush1.msra.mxu0 %v149
  %305 = vmatprep.subr.mxu0 %v158
  %306 = vmatpush1.msra.mxu0 %v157
  %307 = vmatprep.subr.mxu0 %v166
  %308 = vmatpush1.msra.mxu0 %v165
  %309 = vmatprep.subr.mxu0 %v174
  %310 = vmatpush1.msra.mxu0 %v173
  %311 = vmatprep.subr.mxu0 %v182
  %312 = vmatpush1.msra.mxu0 %v181
  %313 = vmatprep.subr.mxu0 %v190
  %314 = vmatpush1.msra.mxu0 %v189
  %315 = vmatprep.subr.mxu0 %v198
  %316 = vmatpush1.msra.mxu0 %v197
  %317 = vmatprep.subr.mxu0 %v206
  %318 = vmatpush1.msra.mxu0 %v205
  %319 = vmatprep.subr.mxu0 %v214
  %320 = vmatpush1.msra.mxu0 %v213
  %321 = vmatprep.subr.mxu0 %v222
  %322 = vmatpush1.msra.mxu0 %v221
  %323 = vmatprep.subr.mxu0 %v230
  %324 = vmatpush1.msra.mxu0 %v229
  %325 = vmatprep.subr.mxu0 %v238
  %326 = vmatpush1.msra.mxu0 %v237
  %327 = vmatprep.subr.mxu0 %v246
  %328 = vmatpush1.msra.mxu0 %v245
  %329 = vmatprep.subr.mxu0 %v254
  %330 = vmatpush1.msra.mxu0 %v253
  %331 = vmatprep.subr.mxu0 %v262
  %332 = vmatpush1.msra.mxu0 %v261
  %333 = vmatprep.mubr.f32.mxu0 %v12
  %334 = vmatmul.mubr.f32.gmra.mrb[0].mxu0 %v11
  %v335 = vpop.f32.mrb[0].mxu0
  %v336 = vadd.f32 0.0, %v335
  %v337 = vpop.f32.mrb[0].mxu0
  %v338 = vadd.f32 0.0, %v337
  %339 = vdwg.mxu0
  %340 = vmatprep.subr.mxu0 %v16
  %341 = vmatpush1.msra.mxu0 %v15
  %342 = vmatprep.subr.mxu0 %v24
  %343 = vmatpush1.msra.mxu0 %v23
  %344 = vmatprep.subr.mxu0 %v32
  %345 = vmatpush1.msra.mxu0 %v31
  %346 = vmatprep.subr.mxu0 %v40
  %347 = vmatpush1.msra.mxu0 %v39
  %348 = vmatprep.subr.mxu0 %v48
  %349 = vmatpush1.msra.mxu0 %v47
  %350 = vmatprep.subr.mxu0 %v56
  %351 = vmatpush1.msra.mxu0 %v55
  %352 = vmatprep.subr.mxu0 %v64
  %353 = vmatpush1.msra.mxu0 %v63
  %354 = vmatprep.subr.mxu0 %v72
  %355 = vmatpush1.msra.mxu0 %v71
  %356 = vmatprep.subr.mxu0 %v80
  %357 = vmatpush1.msra.mxu0 %v79
  %358 = vmatprep.subr.mxu0 %v88
  %359 = vmatpush1.msra.mxu0 %v87
  %360 = vmatprep.subr.mxu0 %v96
  %361 = vmatpush1.msra.mxu0 %v95
  %362 = vmatprep.subr.mxu0 %v104
  %363 = vmatpush1.msra.mxu0 %v103
  %364 = vmatprep.subr.mxu0 %v112
  %365 = vmatpush1.msra.mxu0 %v111
  %366 = vmatprep.subr.mxu0 %v120
  %367 = vmatpush1.msra.mxu0 %v119
  %368 = vmatprep.subr.mxu0 %v128
  %369 = vmatpush1.msra.mxu0 %v127
  %370 = vmatprep.subr.mxu0 %v136
  %371 = vmatpush1.msra.mxu0 %v135
  %372 = vmatprep.subr.mxu0 %v144
  %373 = vmatpush1.msra.mxu0 %v143
  %374 = vmatprep.subr.mxu0 %v152
  %375 = vmatpush1.msra.mxu0 %v151
  %376 = vmatprep.subr.mxu0 %v160
  %377 = vmatpush1.msra.mxu0 %v159
  %378 = vmatprep.subr.mxu0 %v168
  %379 = vmatpush1.msra.mxu0 %v167
  %380 = vmatprep.subr.mxu0 %v176
  %381 = vmatpush1.msra.mxu0 %v175
  %382 = vmatprep.subr.mxu0 %v184
  %383 = vmatpush1.msra.mxu0 %v183
  %384 = vmatprep.subr.mxu0 %v192
  %385 = vmatpush1.msra.mxu0 %v191
  %386 = vmatprep.subr.mxu0 %v200
  %387 = vmatpush1.msra.mxu0 %v199
  %388 = vmatprep.subr.mxu0 %v208
  %389 = vmatpush1.msra.mxu0 %v207
  %390 = vmatprep.subr.mxu0 %v216
  %391 = vmatpush1.msra.mxu0 %v215
  %392 = vmatprep.subr.mxu0 %v224
  %393 = vmatpush1.msra.mxu0 %v223
  %394 = vmatprep.subr.mxu0 %v232
  %395 = vmatpush1.msra.mxu0 %v231
  %396 = vmatprep.subr.mxu0 %v240
  %397 = vmatpush1.msra.mxu0 %v239
  %398 = vmatprep.subr.mxu0 %v248
  %399 = vmatpush1.msra.mxu0 %v247
  %400 = vmatprep.subr.mxu0 %v256
  %401 = vmatpush1.msra.mxu0 %v255
  %402 = vmatprep.subr.mxu0 %v264
  %403 = vmatpush1.msra.mxu0 %v263
  %404 = vmatprep.mubr.f32.mxu0 %v12
  %405 = vmatmul.mubr.f32.gmra.mrb[0].mxu0 %v11
  %v406 = vpop.f32.mrb[0].mxu0
  %v407 = vadd.f32 0.0, %v406
  %v408 = vpop.f32.mrb[0].mxu0
  %v409 = vadd.f32 0.0, %v408
  %410 = vdwg.mxu0
  %411 = vmatprep.subr.mxu0 %v18
  %412 = vmatpush1.msra.mxu0 %v17
  %413 = vmatprep.subr.mxu0 %v26
  %414 = vmatpush1.msra.mxu0 %v25
  %415 = vmatprep.subr.mxu0 %v34
  %416 = vmatpush1.msra.mxu0 %v33
  %417 = vmatprep.subr.mxu0 %v42
  %418 = vmatpush1.msra.mxu0 %v41
  %419 = vmatprep.subr.mxu0 %v50
  %420 = vmatpush1.msra.mxu0 %v49
  %421 = vmatprep.subr.mxu0 %v58
  %422 = vmatpush1.msra.mxu0 %v57
  %423 = vmatprep.subr.mxu0 %v66
  %424 = vmatpush1.msra.mxu0 %v65
  %425 = vmatprep.subr.mxu0 %v74
  %426 = vmatpush1.msra.mxu0 %v73
  %427 = vmatprep.subr.mxu0 %v82
  %428 = vmatpush1.msra.mxu0 %v81
  %429 = vmatprep.subr.mxu0 %v90
  %430 = vmatpush1.msra.mxu0 %v89
  %431 = vmatprep.subr.mxu0 %v98
  %432 = vmatpush1.msra.mxu0 %v97
  %433 = vmatprep.subr.mxu0 %v106
  %434 = vmatpush1.msra.mxu0 %v105
  %435 = vmatprep.subr.mxu0 %v114
  %436 = vmatpush1.msra.mxu0 %v113
  %437 = vmatprep.subr.mxu0 %v122
  %438 = vmatpush1.msra.mxu0 %v121
  %439 = vmatprep.subr.mxu0 %v130
  %440 = vmatpush1.msra.mxu0 %v129
  %441 = vmatprep.subr.mxu0 %v138
  %442 = vmatpush1.msra.mxu0 %v137
  %443 = vmatprep.subr.mxu0 %v146
  %444 = vmatpush1.msra.mxu0 %v145
  %445 = vmatprep.subr.mxu0 %v154
  %446 = vmatpush1.msra.mxu0 %v153
  %447 = vmatprep.subr.mxu0 %v162
  %448 = vmatpush1.msra.mxu0 %v161
  %449 = vmatprep.subr.mxu0 %v170
  %450 = vmatpush1.msra.mxu0 %v169
  %451 = vmatprep.subr.mxu0 %v178
  %452 = vmatpush1.msra.mxu0 %v177
  %453 = vmatprep.subr.mxu0 %v186
  %454 = vmatpush1.msra.mxu0 %v185
  %455 = vmatprep.subr.mxu0 %v194
  %456 = vmatpush1.msra.mxu0 %v193
  %457 = vmatprep.subr.mxu0 %v202
  %458 = vmatpush1.msra.mxu0 %v201
  %459 = vmatprep.subr.mxu0 %v210
  %460 = vmatpush1.msra.mxu0 %v209
  %461 = vmatprep.subr.mxu0 %v218
  %462 = vmatpush1.msra.mxu0 %v217
  %463 = vmatprep.subr.mxu0 %v226
  %464 = vmatpush1.msra.mxu0 %v225
  %465 = vmatprep.subr.mxu0 %v234
  %466 = vmatpush1.msra.mxu0 %v233
  %467 = vmatprep.subr.mxu0 %v242
  %468 = vmatpush1.msra.mxu0 %v241
  %469 = vmatprep.subr.mxu0 %v250
  %470 = vmatpush1.msra.mxu0 %v249
  %471 = vmatprep.subr.mxu0 %v258
  %472 = vmatpush1.msra.mxu0 %v257
  %473 = vmatprep.subr.mxu0 %v266
  %474 = vmatpush1.msra.mxu0 %v265
  %475 = vmatprep.mubr.f32.mxu0 %v12
  %476 = vmatmul.mubr.f32.gmra.mrb[0].mxu0 %v11
  %v477 = vpop.f32.mrb[0].mxu0
  %v478 = vadd.f32 0.0, %v477
  %v479 = vpop.f32.mrb[0].mxu0
  %v480 = vadd.f32 0.0, %v479
  %481 = vdwg.mxu0
  %482 = vmatprep.subr.mxu0 %v20
  %483 = vmatpush1.msra.mxu0 %v19
  %484 = vmatprep.subr.mxu0 %v28
  %485 = vmatpush1.msra.mxu0 %v27
  %486 = vmatprep.subr.mxu0 %v36
  %487 = vmatpush1.msra.mxu0 %v35
  %488 = vmatprep.subr.mxu0 %v44
  %489 = vmatpush1.msra.mxu0 %v43
  %490 = vmatprep.subr.mxu0 %v52
  %491 = vmatpush1.msra.mxu0 %v51
  %492 = vmatprep.subr.mxu0 %v60
  %493 = vmatpush1.msra.mxu0 %v59
  %494 = vmatprep.subr.mxu0 %v68
  %495 = vmatpush1.msra.mxu0 %v67
  %496 = vmatprep.subr.mxu0 %v76
  %497 = vmatpush1.msra.mxu0 %v75
  %498 = vmatprep.subr.mxu0 %v84
  %499 = vmatpush1.msra.mxu0 %v83
  %500 = vmatprep.subr.mxu0 %v92
  %501 = vmatpush1.msra.mxu0 %v91
  %502 = vmatprep.subr.mxu0 %v100
  %503 = vmatpush1.msra.mxu0 %v99
  %504 = vmatprep.subr.mxu0 %v108
  %505 = vmatpush1.msra.mxu0 %v107
  %506 = vmatprep.subr.mxu0 %v116
  %507 = vmatpush1.msra.mxu0 %v115
  %508 = vmatprep.subr.mxu0 %v124
  %509 = vmatpush1.msra.mxu0 %v123
  %510 = vmatprep.subr.mxu0 %v132
  %511 = vmatpush1.msra.mxu0 %v131
  %512 = vmatprep.subr.mxu0 %v140
  %513 = vmatpush1.msra.mxu0 %v139
  %514 = vmatprep.subr.mxu0 %v148
  %515 = vmatpush1.msra.mxu0 %v147
  %516 = vmatprep.subr.mxu0 %v156
  %517 = vmatpush1.msra.mxu0 %v155
  %518 = vmatprep.subr.mxu0 %v164
  %519 = vmatpush1.msra.mxu0 %v163
  %520 = vmatprep.subr.mxu0 %v172
  %521 = vmatpush1.msra.mxu0 %v171
  %522 = vmatprep.subr.mxu0 %v180
  %523 = vmatpush1.msra.mxu0 %v179
  %524 = vmatprep.subr.mxu0 %v188
  %525 = vmatpush1.msra.mxu0 %v187
  %526 = vmatprep.subr.mxu0 %v196
  %527 = vmatpush1.msra.mxu0 %v195
  %528 = vmatprep.subr.mxu0 %v204
  %529 = vmatpush1.msra.mxu0 %v203
  %530 = vmatprep.subr.mxu0 %v212
  %531 = vmatpush1.msra.mxu0 %v211
  %532 = vmatprep.subr.mxu0 %v220
  %533 = vmatpush1.msra.mxu0 %v219
  %534 = vmatprep.subr.mxu0 %v228
  %535 = vmatpush1.msra.mxu0 %v227
  %536 = vmatprep.subr.mxu0 %v236
  %537 = vmatpush1.msra.mxu0 %v235
  %538 = vmatprep.subr.mxu0 %v244
  %539 = vmatpush1.msra.mxu0 %v243
  %540 = vmatprep.subr.mxu0 %v252
  %541 = vmatpush1.msra.mxu0 %v251
  %542 = vmatprep.subr.mxu0 %v260
  %543 = vmatpush1.msra.mxu0 %v259
  %544 = vmatprep.subr.mxu0 %v268
  %545 = vmatpush1.msra.mxu0 %v267
  %546 = vmatprep.mubr.f32.mxu0 %v12
  %547 = vmatmul.mubr.f32.gmra.mrb[0].mxu0 %v11
  %v548 = vpop.f32.mrb[0].mxu0
  %v549 = vadd.f32 0.0, %v548
  %v550 = vpop.f32.mrb[0].mxu0
  %v551 = vadd.f32 0.0, %v550
  %552 = vdwg.mxu0
  %553 = vst [vmem:[%s2] sm:$0xff] %v336
  %554 = vst [vmem:[%s2 + $0x8] sm:$0xff] %v338
  %555 = vst [vmem:[%s2 + $0x10] sm:$0xff] %v407
  %556 = vst [vmem:[%s2 + $0x18] sm:$0xff] %v409
  %557 = vst [vmem:[%s2 + $0x20] sm:$0xff] %v478
  %558 = vst [vmem:[%s2 + $0x28] sm:$0xff] %v480
  %559 = vst [vmem:[%s2 + $0x30] sm:$0xff] %v549
  %560 = vst [vmem:[%s2 + $0x38] sm:$0xff] %v551
  // Predicated region
  $region10: #{upsample_bilinear2d.1} parent=0 // pred_check
    _
  $region11: #{upsample_bilinear2d.1} parent=0 // pred_check_branch
    %562 = sbr.rel (0) target = $region13
  $region12: #{upsample_bilinear2d.1} parent=0 // pred_region
    _
  $region13: #{upsample_bilinear2d.1} parent=0 // pred_fallthru
    _
  // Predicated region
  $region14: #{upsample_bilinear2d.1} parent=0 // pred_check
    _
  $region15: #{upsample_bilinear2d.1} parent=0 // pred_check_branch
    %564 = sbr.rel (0) target = $region17
  $region16: #{upsample_bilinear2d.1} parent=0 // pred_region
    _
  $region17: #{upsample_bilinear2d.1} parent=0 // pred_fallthru
    _

</llo_original>
